<compile_context>
chip_gen: v7x
topology: tpu7x:2x2x1
jax: 0.10.0
libtpu: 0.0.40
codegen_flags: <defaults>
</compile_context>

<pallas_src>
import math
from functools import partial

import jax
import jax.numpy as jnp
from jax.experimental import pallas as pl
from jax.experimental.pallas import tpu as pltpu


N_OBSERVATIONS = 4   # CartPole-v1 observation dim
N_ACTIONS = 2        # CartPole-v1 action dim
HIDDEN = 128


def _round_up(n, m):
    return ((n + m - 1) // m) * m


def dqn_kernel(x_ref, w1_ref, b1_ref, w2_ref, b2_ref, w3_ref, b3_ref, out_ref):
    x = x_ref[...]            # (TB, 4)  f32
    w1 = w1_ref[...]          # (4, 128) f32

    # Layer 1 (K=4): rank-1 VPU updates (an MXU pass with K=4 would be ~97% idle;
    # VALU has slack in this overhead/DMA-bound regime, so this is at worst neutral).
    h = x[:, 0:1] * w1[0:1, :]
    for k in range(1, N_OBSERVATIONS):
        h = h + x[:, k:k + 1] * w1[k:k + 1, :]
    h = jnp.maximum(h + b1_ref[...], 0.0)                          # (TB, 128) f32

    # Layer 2 (K=128): bf16 operands, f32 accumulation on the MXU.
    h = jnp.dot(h.astype(jnp.bfloat16), w2_ref[...],
                preferred_element_type=jnp.float32)
    h = jnp.maximum(h + b2_ref[...], 0.0)                          # (TB, 128) f32

    # Layer 3: w3/b3 zero-padded to 128 lanes -> lane-dense store. Q values are
    # computed in f32 and stored as bf16 to halve the only large HBM stream.
    q = jnp.dot(h.astype(jnp.bfloat16), w3_ref[...],
                preferred_element_type=jnp.float32)
    out_ref[...] = (q + b3_ref[...]).astype(jnp.bfloat16)          # (TB, 128) bf16


def prepare_params(params):
    """One-time kernel-side parameter layout (call only when weights change).

    Big weights in bf16 (halves weight DMA bytes, bf16 MXU passes), biases in f32,
    w3/b3 zero-padded to 128 lanes so the kernel's output store stays lane-dense.
    """
    w1, b1, w2, b2, w3, b3 = params
    w1k = w1.astype(jnp.float32)                                   # (4, 128)
    b1k = b1.reshape(1, HIDDEN).astype(jnp.float32)                # (1, 128)
    w2k = w2.astype(jnp.bfloat16)                                  # (128, 128)
    b2k = b2.reshape(1, HIDDEN).astype(jnp.float32)                # (1, 128)
    w3k = jnp.zeros((HIDDEN, HIDDEN), jnp.bfloat16).at[:, :N_ACTIONS].set(
        w3.astype(jnp.bfloat16))                                   # (128, 128)
    b3k = jnp.zeros((1, HIDDEN), jnp.float32).at[:, :N_ACTIONS].set(
        b3.reshape(1, N_ACTIONS).astype(jnp.float32))              # (1, 128)
    return (w1k, b1k, w2k, b2k, w3k, b3k)


def _choose_tile(b_aligned, tile_b):
    """Pick the batch-tile size (multiple of 16; grid >= 2 once batch > 256 rows)."""
    tile_b = max(16, _round_up(tile_b, 16))
    if b_aligned <= 256:
        return b_aligned                       # acting path: one small tile
    # Force at least two grid steps so ("parallel",) shards across v7x's 2 TCs.
    half = _round_up((b_aligned + 1) // 2, 256)
    return min(tile_b, half)


@partial(jax.jit, static_argnames=("tile_b",))
def dqn_forward(x, prepared_params, *, tile_b=1024):
    """x: (B, n_observations) -> Q-values (B, n_actions) float32."""
    w1k, b1k, w2k, b2k, w3k, b3k = prepared_params
    B = x.shape[0]

    # Batch padded to a multiple of 16 (bf16 output sublane tile), tiled over a
    # 1-D "parallel" grid; weights use constant block indices (DMA'd once).
    b_aligned = _round_up(B, 16)
    TB = _choose_tile(b_aligned, tile_b)
    Bp = _round_up(b_aligned, TB)
    xp = jnp.zeros((Bp, N_OBSERVATIONS), jnp.float32).at[:B].set(
        x.astype(jnp.float32))

    const = lambda i: (0, 0)
    out_padded = pl.pallas_call(
        dqn_kernel,
        out_shape=jax.ShapeDtypeStruct((Bp, HIDDEN), jnp.bfloat16),
        grid=(Bp // TB,),
        in_specs=[
            pl.BlockSpec((TB, N_OBSERVATIONS), lambda i: (i, 0)),  # x batch tile
            pl.BlockSpec((N_OBSERVATIONS, HIDDEN), const),         # w1 (f32)
            pl.BlockSpec((1, HIDDEN), const),                      # b1
            pl.BlockSpec((HIDDEN, HIDDEN), const),                 # w2 (bf16)
            pl.BlockSpec((1, HIDDEN), const),                      # b2
            pl.BlockSpec((HIDDEN, HIDDEN), const),                 # w3 padded (bf16)
            pl.BlockSpec((1, HIDDEN), const),                      # b3 padded
        ],
        out_specs=pl.BlockSpec((TB, HIDDEN), lambda i: (i, 0)),
        compiler_params=pltpu.CompilerParams(
            dimension_semantics=("parallel",)),
    )(xp, w1k, b1k, w2k, b2k, w3k, b3k)

    return out_padded[:B, :N_ACTIONS].astype(jnp.float32)


def init_params(key):
    """Deterministic init mimicking PyTorch nn.Linear default (U(-1/sqrt(fan_in), +))."""
    ks = jax.random.split(key, 6)

    def linear(kw, kb, fan_in, fan_out):
        bound = 1.0 / math.sqrt(fan_in)
        w = jax.random.uniform(kw, (fan_in, fan_out), jnp.float32, -bound, bound)
        b = jax.random.uniform(kb, (1, fan_out), jnp.float32, -bound, bound)
        return w, b

    w1, b1 = linear(ks[0], ks[1], N_OBSERVATIONS, HIDDEN)
    w2, b2 = linear(ks[2], ks[3], HIDDEN, HIDDEN)
    w3, b3 = linear(ks[4], ks[5], HIDDEN, N_ACTIONS)
    return (w1, b1, w2, b2, w3, b3)


def dqn_reference(x, params):
    w1, b1, w2, b2, w3, b3 = params
    h1 = jnp.maximum(x @ w1 + b1, 0.0)
    h2 = jnp.maximum(h1 @ w2 + b2, 0.0)
    return h2 @ w3 + b3


if __name__ == "__main__":
    key = jax.random.PRNGKey(0)
    k_params, k_x, k_x2, k_x3 = jax.random.split(key, 4)
    params = init_params(k_params)
    kparams = prepare_params(params)              # one-time, hoisted out of forward
    kparams = jax.block_until_ready(kparams)

    # bf16 weights (layers 2/3) + bf16 output store -> ~1% relative deviation vs f32.
    TOL = dict(atol=5e-2, rtol=5e-2)

    # Small acting-path batch (padded to 16 rows internally, grid=(1,)).
    batch = 2
    x = jax.random.normal(k_x, (batch, N_OBSERVATIONS), jnp.float32)
    q_kernel = dqn_forward(x, kparams)
    jax.block_until_ready(q_kernel)
    q_ref = dqn_reference(x, params)
    assert q_kernel.shape == (batch, N_ACTIONS)
    assert jnp.allclose(q_kernel, q_ref, **TOL)

    # Replay-style batch, non-multiple of tile (304 aligned -> two 256-row tiles).
    batch2 = 300
    x2 = jax.random.normal(k_x2, (batch2, N_OBSERVATIONS), jnp.float32)
    q2 = dqn_forward(x2, kparams)
    jax.block_until_ready(q2)
    q2_ref = dqn_reference(x2, params)
    assert q2.shape == (batch2, N_ACTIONS)
    assert jnp.allclose(q2, q2_ref, **TOL)

    # Large batch exercising >=2 grid steps with the full 1024-row tile.
    batch3 = 2048
    x3 = jax.random.normal(k_x3, (batch3, N_OBSERVATIONS), jnp.float32)
    q3 = dqn_forward(x3, kparams)
    jax.block_until_ready(q3)
    q3_ref = dqn_reference(x3, params)
    assert q3.shape == (batch3, N_ACTIONS)
    assert jnp.allclose(q3, q3_ref, **TOL)

    print("KERNEL_OK")
</pallas_src>

<mosaic_0001>
module attributes {stable_mosaic.version = 11 : i64} {
  func.func @dqn_kernel(%arg0: i32, %arg1: memref<16x4xf32, #tpu.memory_space<vmem>>, %arg2: memref<4x128xf32, #tpu.memory_space<vmem>>, %arg3: memref<1x128xf32, #tpu.memory_space<vmem>>, %arg4: memref<128x128xbf16, #tpu.memory_space<vmem>>, %arg5: memref<1x128xf32, #tpu.memory_space<vmem>>, %arg6: memref<128x128xbf16, #tpu.memory_space<vmem>>, %arg7: memref<1x128xf32, #tpu.memory_space<vmem>>, %arg8: memref<16x128xbf16, #tpu.memory_space<vmem>>) attributes {dimension_semantics = [#tpu.dimension_semantics<parallel>], iteration_bounds = array<i64: 1>, scalar_prefetch = 0 : i64, scratch_operands = 0 : i64, tpu.core_type = #tpu.core_type<tc>, window_params = [{transform_indices = @transform_0, window_bounds = array<i64: 16, 4>}, {pipeline_mode = #tpu.pipeline_mode<synchronous>, transform_indices = @transform_1, window_bounds = array<i64: 4, 128>}, {pipeline_mode = #tpu.pipeline_mode<synchronous>, transform_indices = @transform_2, window_bounds = array<i64: 1, 128>}, {pipeline_mode = #tpu.pipeline_mode<synchronous>, transform_indices = @transform_3, window_bounds = array<i64: 128, 128>}, {pipeline_mode = #tpu.pipeline_mode<synchronous>, transform_indices = @transform_4, window_bounds = array<i64: 1, 128>}, {pipeline_mode = #tpu.pipeline_mode<synchronous>, transform_indices = @transform_5, window_bounds = array<i64: 128, 128>}, {pipeline_mode = #tpu.pipeline_mode<synchronous>, transform_indices = @transform_6, window_bounds = array<i64: 1, 128>}, {transform_indices = @transform_7, window_bounds = array<i64: 16, 128>}]} {
    %c0 = arith.constant 0 : index
    %c0_0 = arith.constant 0 : index
    %0 = vector.load %arg1[%c0, %c0_0] : memref<16x4xf32, #tpu.memory_space<vmem>>, vector<16x4xf32>
    %c0_1 = arith.constant 0 : index
    %c0_2 = arith.constant 0 : index
    %1 = vector.load %arg2[%c0_1, %c0_2] : memref<4x128xf32, #tpu.memory_space<vmem>>, vector<4x128xf32>
    %2 = vector.extract_strided_slice %0 {offsets = [0, 0], sizes = [16, 1], strides = [1, 1]} : vector<16x4xf32> to vector<16x1xf32>
    %3 = vector.extract_strided_slice %1 {offsets = [0, 0], sizes = [1, 128], strides = [1, 1]} : vector<4x128xf32> to vector<1x128xf32>
    %4 = vector.broadcast %2 : vector<16x1xf32> to vector<16x128xf32>
    %5 = vector.broadcast %3 : vector<1x128xf32> to vector<16x128xf32>
    %6 = arith.mulf %4, %5 : vector<16x128xf32>
    %7 = vector.extract_strided_slice %0 {offsets = [0, 1], sizes = [16, 1], strides = [1, 1]} : vector<16x4xf32> to vector<16x1xf32>
    %8 = vector.extract_strided_slice %1 {offsets = [1, 0], sizes = [1, 128], strides = [1, 1]} : vector<4x128xf32> to vector<1x128xf32>
    %9 = vector.broadcast %7 : vector<16x1xf32> to vector<16x128xf32>
    %10 = vector.broadcast %8 : vector<1x128xf32> to vector<16x128xf32>
    %11 = arith.mulf %9, %10 : vector<16x128xf32>
    %12 = arith.addf %6, %11 : vector<16x128xf32>
    %13 = vector.extract_strided_slice %0 {offsets = [0, 2], sizes = [16, 1], strides = [1, 1]} : vector<16x4xf32> to vector<16x1xf32>
    %14 = vector.extract_strided_slice %1 {offsets = [2, 0], sizes = [1, 128], strides = [1, 1]} : vector<4x128xf32> to vector<1x128xf32>
    %15 = vector.broadcast %13 : vector<16x1xf32> to vector<16x128xf32>
    %16 = vector.broadcast %14 : vector<1x128xf32> to vector<16x128xf32>
    %17 = arith.mulf %15, %16 : vector<16x128xf32>
    %18 = arith.addf %12, %17 : vector<16x128xf32>
    %19 = vector.extract_strided_slice %0 {offsets = [0, 3], sizes = [16, 1], strides = [1, 1]} : vector<16x4xf32> to vector<16x1xf32>
    %20 = vector.extract_strided_slice %1 {offsets = [3, 0], sizes = [1, 128], strides = [1, 1]} : vector<4x128xf32> to vector<1x128xf32>
    %21 = vector.broadcast %19 : vector<16x1xf32> to vector<16x128xf32>
    %22 = vector.broadcast %20 : vector<1x128xf32> to vector<16x128xf32>
    %23 = arith.mulf %21, %22 : vector<16x128xf32>
    %24 = arith.addf %18, %23 : vector<16x128xf32>
    %c0_3 = arith.constant 0 : index
    %c0_4 = arith.constant 0 : index
    %25 = vector.load %arg3[%c0_3, %c0_4] : memref<1x128xf32, #tpu.memory_space<vmem>>, vector<1x128xf32>
    %26 = vector.broadcast %25 : vector<1x128xf32> to vector<16x128xf32>
    %27 = arith.addf %24, %26 : vector<16x128xf32>
    %cst = arith.constant 0.000000e+00 : f32
    %28 = vector.broadcast %cst : f32 to vector<16x128xf32>
    %29 = arith.maximumf %27, %28 : vector<16x128xf32>
    %30 = arith.truncf %29 : vector<16x128xf32> to vector<16x128xbf16>
    %c0_5 = arith.constant 0 : index
    %c0_6 = arith.constant 0 : index
    %31 = vector.load %arg4[%c0_5, %c0_6] : memref<128x128xbf16, #tpu.memory_space<vmem>>, vector<128x128xbf16>
    %cst_7 = arith.constant dense<0.000000e+00> : vector<16x128xf32>
    %32 = tpu.matmul %30, %31, %cst_7 {dimension_numbers = #tpu.dot_dimension_numbers<[1], [0], [0], [1], [0, 0, 1, 1], [], []>} : vector<16x128xbf16>, vector<128x128xbf16>, vector<16x128xf32> -> vector<16x128xf32>
    %c0_8 = arith.constant 0 : index
    %c0_9 = arith.constant 0 : index
    %33 = vector.load %arg5[%c0_8, %c0_9] : memref<1x128xf32, #tpu.memory_space<vmem>>, vector<1x128xf32>
    %34 = vector.broadcast %33 : vector<1x128xf32> to vector<16x128xf32>
    %35 = arith.addf %32, %34 : vector<16x128xf32>
    %cst_10 = arith.constant 0.000000e+00 : f32
    %36 = vector.broadcast %cst_10 : f32 to vector<16x128xf32>
    %37 = arith.maximumf %35, %36 : vector<16x128xf32>
    %38 = arith.truncf %37 : vector<16x128xf32> to vector<16x128xbf16>
    %c0_11 = arith.constant 0 : index
    %c0_12 = arith.constant 0 : index
    %39 = vector.load %arg6[%c0_11, %c0_12] : memref<128x128xbf16, #tpu.memory_space<vmem>>, vector<128x128xbf16>
    %cst_13 = arith.constant dense<0.000000e+00> : vector<16x128xf32>
    %40 = tpu.matmul %38, %39, %cst_13 {dimension_numbers = #tpu.dot_dimension_numbers<[1], [0], [0], [1], [0, 0, 1, 1], [], []>} : vector<16x128xbf16>, vector<128x128xbf16>, vector<16x128xf32> -> vector<16x128xf32>
    %c0_14 = arith.constant 0 : index
    %c0_15 = arith.constant 0 : index
    %41 = vector.load %arg7[%c0_14, %c0_15] : memref<1x128xf32, #tpu.memory_space<vmem>>, vector<1x128xf32>
    %42 = vector.broadcast %41 : vector<1x128xf32> to vector<16x128xf32>
    %43 = arith.addf %40, %42 : vector<16x128xf32>
    %44 = arith.truncf %43 : vector<16x128xf32> to vector<16x128xbf16>
    %c0_16 = arith.constant 0 : index
    %c0_17 = arith.constant 0 : index
    %45 = vector.load %arg8[%c0_16, %c0_17] : memref<16x128xbf16, #tpu.memory_space<vmem>>, vector<16x128xbf16>
    tpu.vector_store %arg8[%c0_16, %c0_17], %44 {strides = array<i32>} : memref<16x128xbf16, #tpu.memory_space<vmem>>, vector<16x128xbf16>,
    return
  }
  func.func @transform_0(%arg0: i32) -> (i32, i32) {
    %c0_i32 = arith.constant 0 : i32
    %c0_i32_0 = arith.constant 0 : i32
    return %arg0, %c0_i32 : i32, i32
  }
  func.func @transform_1(%arg0: i32) -> (i32, i32) {
    %c0_i32 = arith.constant 0 : i32
    %c0_i32_0 = arith.constant 0 : i32
    %c0_i32_1 = arith.constant 0 : i32
    return %c0_i32, %c0_i32_0 : i32, i32
  }
  func.func @transform_2(%arg0: i32) -> (i32, i32) {
    %c0_i32 = arith.constant 0 : i32
    %c0_i32_0 = arith.constant 0 : i32
    %c0_i32_1 = arith.constant 0 : i32
    return %c0_i32, %c0_i32_0 : i32, i32
  }
  func.func @transform_3(%arg0: i32) -> (i32, i32) {
    %c0_i32 = arith.constant 0 : i32
    %c0_i32_0 = arith.constant 0 : i32
    %c0_i32_1 = arith.constant 0 : i32
    return %c0_i32, %c0_i32_0 : i32, i32
  }
  func.func @transform_4(%arg0: i32) -> (i32, i32) {
    %c0_i32 = arith.constant 0 : i32
    %c0_i32_0 = arith.constant 0 : i32
    %c0_i32_1 = arith.constant 0 : i32
    return %c0_i32, %c0_i32_0 : i32, i32
  }
  func.func @transform_5(%arg0: i32) -> (i32, i32) {
    %c0_i32 = arith.constant 0 : i32
    %c0_i32_0 = arith.constant 0 : i32
    %c0_i32_1 = arith.constant 0 : i32
    return %c0_i32, %c0_i32_0 : i32, i32
  }
  func.func @transform_6(%arg0: i32) -> (i32, i32) {
    %c0_i32 = arith.constant 0 : i32
    %c0_i32_0 = arith.constant 0 : i32
    %c0_i32_1 = arith.constant 0 : i32
    return %c0_i32, %c0_i32_0 : i32, i32
  }
  func.func @transform_7(%arg0: i32) -> (i32, i32) {
    %c0_i32 = arith.constant 0 : i32
    %c0_i32_0 = arith.constant 0 : i32
    return %arg0, %c0_i32 : i32, i32
  }
}

</mosaic_0001>

<llo_original>
// kernel: dqn_forward.1
$region0: #{dqn_forward.1}
  #allocation0 [shape = 'u32[]', space=smem, size = 0x4, offset = 0x4, fixed_abs, tag = 'smem constant byte address 0x4 - core index']
  #allocation1 [shape = 'u32[144,128]{1,0:T(1,128)}', space=vmem, size = 0x12000, scoped, tag = 'internal scratch']
  %s0 = inlined_call_operand.vmem [shape: f32[16,4], index: 0, kind: input, shape index: {}]
  %s1 = inlined_call_operand.vmem [shape: f32[4,128], index: 1, kind: input, shape index: {}]
  %s2 = inlined_call_operand.vmem [shape: f32[1,128], index: 2, kind: input, shape index: {}]
  %s3 = inlined_call_operand.hbm [shape: bf16[128,128], index: 3, kind: input, shape index: {}]
  %s4 = inlined_call_operand.vmem [shape: f32[1,128], index: 4, kind: input, shape index: {}]
  %s5 = inlined_call_operand.hbm [shape: bf16[128,128], index: 5, kind: input, shape index: {}]
  %s6 = inlined_call_operand.vmem [shape: f32[1,128], index: 6, kind: input, shape index: {}]
  %s7 = inlined_call_operand.vmem [shape: bf16[16,128], index: 7, kind: output, shape index: {}]
  %s8 = sld [smem:[#allocation0]]
  $region46: #{dqn_forward.1} parent=0
    _
  %s10 = ssub.s32 1, %s8
  %s11 = scalar_select 0, %s10, %s8
  $region1: #{dqn_forward.1} parent=0
    #allocation2 [shape = 'u8[32768]{0}', space=vmem, size = 0x8000, scoped, tag = 'input window, operand 3, single buffered']
    #allocation3 [shape = 's32[1]{0}', space=sflag, size = 0x4, scoped, tag = 'scoped memory for dqn_forward.1']
    #allocation4 [shape = 'u8[32768]{0}', space=vmem, size = 0x8000, scoped, tag = 'input window, operand 5, single buffered']
    #allocation5 [shape = 's32[1]{0}', space=sflag, size = 0x4, scoped, tag = 'scoped memory for dqn_forward.1']
    %12 = vsyncpa [#allocation3], 0
    %13 = vsyncpa [#allocation5], 0
    // Predicated region
    $region2: #{dqn_forward.1} parent=1 // pred_check
      _
    $region3: #{dqn_forward.1} parent=1 // pred_check_branch
      %15 = sbr.rel (0) target = $region5
    $region4: #{dqn_forward.1} parent=1 // pred_region
      _
    $region5: #{dqn_forward.1} parent=1 // pred_fallthru
      _
    // Predicated region
    $region6: #{dqn_forward.1} parent=1 // pred_check
      _
    $region7: #{dqn_forward.1} parent=1 // pred_check_branch
      %17 = sbr.rel (0) target = $region9
    $region8: #{dqn_forward.1} parent=1 // pred_region
      _
    $region9: #{dqn_forward.1} parent=1 // pred_fallthru
      _
    // Predicated region
    $region10: #{dqn_forward.1} parent=1 // pred_check
      _
    $region11: #{dqn_forward.1} parent=1 // pred_check_branch
      %19 = sbr.rel (0) target = $region13
    $region12: #{dqn_forward.1} parent=1 // pred_region
      _
    $region13: #{dqn_forward.1} parent=1 // pred_fallthru
      _
    // Predicated region
    $region14: #{dqn_forward.1} parent=1 // pred_check
      _
    $region15: #{dqn_forward.1} parent=1 // pred_check_branch
      %21 = sbr.rel (0) target = $region17
    $region16: #{dqn_forward.1} parent=1 // pred_region
      %s23 = ssub.s32 1024, 1024
      %24 = vsyncadd [#allocation3], %s23
      %s25 = sshll.u32 [#allocation2], 4
      %s26 = int_to_ptr.vmem [resolvable:$true] %s25
      %31 = dma.hbm_to_vmem [thread:$0]  %s3, 1024, %s26, [#allocation3], 64, 64, 4
    $region17: #{dqn_forward.1} parent=1 // pred_fallthru
      _
    // Predicated region
    $region18: #{dqn_forward.1} parent=1 // pred_check
      _
    $region19: #{dqn_forward.1} parent=1 // pred_check_branch
      %33 = sbr.rel (0) target = $region21
    $region20: #{dqn_forward.1} parent=1 // pred_region
      _
    $region21: #{dqn_forward.1} parent=1 // pred_fallthru
      _
    // Predicated region
    $region22: #{dqn_forward.1} parent=1 // pred_check
      _
    $region23: #{dqn_forward.1} parent=1 // pred_check_branch
      %35 = sbr.rel (0) target = $region25
    $region24: #{dqn_forward.1} parent=1 // pred_region
      %s37 = ssub.s32 1024, 1024
      %38 = vsyncadd [#allocation5], %s37
      %s39 = sshll.u32 [#allocation4], 4
      %s40 = int_to_ptr.vmem [resolvable:$true] %s39
      %45 = dma.hbm_to_vmem [thread:$0]  %s5, 1024, %s40, [#allocation5], 64, 64, 4
    $region25: #{dqn_forward.1} parent=1 // pred_fallthru
      _
    // Predicated region
    $region26: #{dqn_forward.1} parent=1 // pred_check
      _
    $region27: #{dqn_forward.1} parent=1 // pred_check_branch
      %47 = sbr.rel (0) target = $region29
    $region28: #{dqn_forward.1} parent=1 // pred_region
      _
    $region29: #{dqn_forward.1} parent=1 // pred_fallthru
      _
    // Predicated region
    $region30: #{dqn_forward.1} parent=1 // pred_check
      _
    $region31: #{dqn_forward.1} parent=1 // pred_check_branch
      %49 = sbr.rel (0) target = $region33
    $region32: #{dqn_forward.1} parent=1 // pred_region
      %50 = dma.done [#allocation3], 1024
    $region33: #{dqn_forward.1} parent=1 // pred_fallthru
      _
    // Predicated region
    $region34: #{dqn_forward.1} parent=1 // pred_check
      _
    $region35: #{dqn_forward.1} parent=1 // pred_check_branch
      %52 = sbr.rel (0) target = $region37
    $region36: #{dqn_forward.1} parent=1 // pred_region
      %53 = dma.done [#allocation5], 1024
    $region37: #{dqn_forward.1} parent=1 // pred_fallthru
      _
    %v55 = vld [vmem:[%s0] sm:$0xff]
    %v56 = vld [vmem:[%s0 + $0x8] sm:$0xff]
    %v57 = vld [vmem:[%s1] sm:$0xf]
    %59 = vset.pattern.permute.xlu0 0
    %60 = vperm.xlu0 %59, %v55
    %v61 = vpop.permute.xlu0 %60
    %64 = vset.pattern.permute.xlu0 0
    %65 = vperm.xlu0 %64, %v56
    %v66 = vpop.permute.xlu0 %65
    %v68 = vlaneseq
    %v69 = vshrl.u32 %v68, 7
    %v70 = vsub.s32 0, %v69
    %v71 = vrot.slane %v57, %v70
    %v72 = vmul.f32 %v61, %v71
    %v73 = vmul.f32 %v66, %v71
    %74 = vset.pattern.permute.xlu0 1
    %75 = vperm.xlu0 %74, %v55
    %v76 = vpop.permute.xlu0 %75
    %78 = vset.pattern.permute.xlu0 1
    %79 = vperm.xlu0 %78, %v56
    %v80 = vpop.permute.xlu0 %79
    %v82 = vlaneseq
    %v83 = vshrl.u32 %v82, 7
    %v84 = vsub.s32 1, %v83
    %v85 = vrot.slane %v57, %v84
    %v86 = vmul.f32 %v76, %v85
    %v87 = vmul.f32 %v80, %v85
    %v88 = vadd.f32 %v72, %v86
    %v89 = vadd.f32 %v73, %v87
    %90 = vset.pattern.permute.xlu0 2
    %91 = vperm.xlu0 %90, %v55
    %v92 = vpop.permute.xlu0 %91
    %94 = vset.pattern.permute.xlu0 2
    %95 = vperm.xlu0 %94, %v56
    %v96 = vpop.permute.xlu0 %95
    %v98 = vlaneseq
    %v99 = vshrl.u32 %v98, 7
    %v100 = vsub.s32 2, %v99
    %v101 = vrot.slane %v57, %v100
    %v102 = vmul.f32 %v92, %v101
    %v103 = vmul.f32 %v96, %v101
    %v104 = vadd.f32 %v88, %v102
    %v105 = vadd.f32 %v89, %v103
    %106 = vset.pattern.permute.xlu0 3
    %107 = vperm.xlu0 %106, %v55
    %v108 = vpop.permute.xlu0 %107
    %110 = vset.pattern.permute.xlu0 3
    %111 = vperm.xlu0 %110, %v56
    %v112 = vpop.permute.xlu0 %111
    %v114 = vlaneseq
    %v115 = vshrl.u32 %v114, 7
    %v116 = vsub.s32 3, %v115
    %v117 = vrot.slane %v57, %v116
    %v118 = vmul.f32 %v108, %v117
    %v119 = vmul.f32 %v112, %v117
    %v120 = vadd.f32 %v104, %v118
    %v121 = vadd.f32 %v105, %v119
    %v122 = vld [vmem:[%s2] sm:$0x1]
    %v124 = vlaneseq
    %v125 = vshrl.u32 %v124, 7
    %v126 = vsub.s32 0, %v125
    %v127 = vrot.slane %v122, %v126
    %v129 = vadd.f32 %v120, %v127
    %v130 = vadd.f32 %v121, %v127
    %v131 = vmax.f32 %v129, 0.0
    %v132 = vmax.f32 %v130, 0.0
    %v133 = vpack.c.bf16 %v132, %v131
    %v134 = vld [vmem:[#allocation2] sm:$0xf]
    %v135 = vld [vmem:[#allocation2 + $0x4] sm:$0xf]
    %v136 = vld [vmem:[#allocation2 + $0x8] sm:$0xf]
    %v137 = vld [vmem:[#allocation2 + $0xc] sm:$0xf]
    %v138 = vld [vmem:[#allocation2 + $0x10] sm:$0xf]
    %v139 = vld [vmem:[#allocation2 + $0x14] sm:$0xf]
    %v140 = vld [vmem:[#allocation2 + $0x18] sm:$0xf]
    %v141 = vld [vmem:[#allocation2 + $0x1c] sm:$0xf]
    %v142 = vld [vmem:[#allocation2 + $0x20] sm:$0xf]
    %v143 = vld [vmem:[#allocation2 + $0x24] sm:$0xf]
    %v144 = vld [vmem:[#allocation2 + $0x28] sm:$0xf]
    %v145 = vld [vmem:[#allocation2 + $0x2c] sm:$0xf]
    %v146 = vld [vmem:[#allocation2 + $0x30] sm:$0xf]
    %v147 = vld [vmem:[#allocation2 + $0x34] sm:$0xf]
    %v148 = vld [vmem:[#allocation2 + $0x38] sm:$0xf]
    %v149 = vld [vmem:[#allocation2 + $0x3c] sm:$0xf]
    %v150 = vld [vmem:[%s4] sm:$0x1]
    %v152 = vlaneseq
    %v153 = vshrl.u32 %v152, 7
    %v154 = vsub.s32 0, %v153
    %v155 = vrot.slane %v150, %v154
    %v173 = vunpack.c.l.b16 %v134
    %v174 = vunpack.c.l.b16 %v135
    %v175 = vunpack.c.l.b16 %v136
    %v176 = vunpack.c.l.b16 %v137
    %v177 = vunpack.c.l.b16 %v138
    %v178 = vunpack.c.l.b16 %v139
    %v179 = vunpack.c.l.b16 %v140
    %v180 = vunpack.c.l.b16 %v141
    %v181 = vunpack.c.l.b16 %v142
    %v182 = vunpack.c.l.b16 %v143
    %v183 = vunpack.c.l.b16 %v144
    %v184 = vunpack.c.l.b16 %v145
    %v185 = vunpack.c.l.b16 %v146
    %v186 = vunpack.c.l.b16 %v147
    %v187 = vunpack.c.l.b16 %v148
    %v188 = vunpack.c.l.b16 %v149
    %v189 = vpack.c.b16 %v174, %v173
    %v190 = vpack.c.b16 %v176, %v175
    %v191 = vpack.c.b16 %v178, %v177
    %v192 = vpack.c.b16 %v180, %v179
    %v193 = vpack.c.b16 %v182, %v181
    %v194 = vpack.c.b16 %v184, %v183
    %v195 = vpack.c.b16 %v186, %v185
    %v196 = vpack.c.b16 %v188, %v187
    %205 = vmatprep.subr.bf16.mxu0 0
    %206 = vmatpush1.bf16.msra.mxu0 %v189
    %207 = vmatprep.subr.bf16.mxu0 0
    %208 = vmatpush1.bf16.msra.mxu0 %v190
    %209 = vmatprep.subr.bf16.mxu0 0
    %210 = vmatpush1.bf16.msra.mxu0 %v191
    %211 = vmatprep.subr.bf16.mxu0 0
    %212 = vmatpush1.bf16.msra.mxu0 %v192
    %213 = vmatprep.subr.bf16.mxu0 0
    %214 = vmatpush1.bf16.msra.mxu0 %v193
    %215 = vmatprep.subr.bf16.mxu0 0
    %216 = vmatpush1.bf16.msra.mxu0 %v194
    %217 = vmatprep.subr.bf16.mxu0 0
    %218 = vmatpush1.bf16.msra.mxu0 %v195
    %219 = vmatprep.subr.bf16.mxu0 0
    %220 = vmatpush1.bf16.msra.mxu0 %v196
    %221 = vmatprep.subr.bf16.mxu0 0
    %222 = vmatpush1.bf16.msra.mxu0 0
    %223 = vmatprep.subr.bf16.mxu0 0
    %224 = vmatpush1.bf16.msra.mxu0 0
    %225 = vmatprep.subr.bf16.mxu0 0
    %226 = vmatpush1.bf16.msra.mxu0 0
    %227 = vmatprep.subr.bf16.mxu0 0
    %228 = vmatpush1.bf16.msra.mxu0 0
    %229 = vmatprep.subr.bf16.mxu0 0
    %230 = vmatpush1.bf16.msra.mxu0 0
    %231 = vmatprep.subr.bf16.mxu0 0
    %232 = vmatpush1.bf16.msra.mxu0 0
    %233 = vmatprep.subr.bf16.mxu0 0
    %234 = vmatpush1.bf16.msra.mxu0 0
    %235 = vmatprep.subr.bf16.mxu0 0
    %236 = vmatpush1.bf16.msra.mxu0 0
    %237 = vmatprep.mubr.bf16.mxu0 0
    %238 = vmatmul.mubr.bf16.gmra.mrb[0].mxu0 %v133
    %v239 = vpop.f32.mrb[0].mxu0
    %v240 = vadd.f32 %v155, %v239
    %v241 = vpop.f32.mrb[0].mxu0
    %v242 = vpop.f32.mrb[0].mxu0
    %v243 = vadd.f32 %v155, %v242
    %v244 = vpop.f32.mrb[0].mxu0
    %245 = vdwg.mxu0
    %v246 = vmax.f32 %v240, 0.0
    %v247 = vmax.f32 %v243, 0.0
    %v248 = vpack.c.bf16 %v247, %v246
    %v249 = vld [vmem:[#allocation4] sm:$0xf]
    %v250 = vld [vmem:[#allocation4 + $0x4] sm:$0xf]
    %v251 = vld [vmem:[#allocation4 + $0x8] sm:$0xf]
    %v252 = vld [vmem:[#allocation4 + $0xc] sm:$0xf]
    %v253 = vld [vmem:[#allocation4 + $0x10] sm:$0xf]
    %v254 = vld [vmem:[#allocation4 + $0x14] sm:$0xf]
    %v255 = vld [vmem:[#allocation4 + $0x18] sm:$0xf]
    %v256 = vld [vmem:[#allocation4 + $0x1c] sm:$0xf]
    %v257 = vld [vmem:[#allocation4 + $0x20] sm:$0xf]
    %v258 = vld [vmem:[#allocation4 + $0x24] sm:$0xf]
    %v259 = vld [vmem:[#allocation4 + $0x28] sm:$0xf]
    %v260 = vld [vmem:[#allocation4 + $0x2c] sm:$0xf]
    %v261 = vld [vmem:[#allocation4 + $0x30] sm:$0xf]
    %v262 = vld [vmem:[#allocation4 + $0x34] sm:$0xf]
    %v263 = vld [vmem:[#allocation4 + $0x38] sm:$0xf]
    %v264 = vld [vmem:[#allocation4 + $0x3c] sm:$0xf]
    %v265 = vld [vmem:[%s6] sm:$0x1]
    %v267 = vlaneseq
    %v268 = vshrl.u32 %v267, 7
    %v269 = vsub.s32 0, %v268
    %v270 = vrot.slane %v265, %v269
    %v288 = vunpack.c.l.b16 %v249
    %v289 = vunpack.c.l.b16 %v250
    %v290 = vunpack.c.l.b16 %v251
    %v291 = vunpack.c.l.b16 %v252
    %v292 = vunpack.c.l.b16 %v253
    %v293 = vunpack.c.l.b16 %v254
    %v294 = vunpack.c.l.b16 %v255
    %v295 = vunpack.c.l.b16 %v256
    %v296 = vunpack.c.l.b16 %v257
    %v297 = vunpack.c.l.b16 %v258
    %v298 = vunpack.c.l.b16 %v259
    %v299 = vunpack.c.l.b16 %v260
    %v300 = vunpack.c.l.b16 %v261
    %v301 = vunpack.c.l.b16 %v262
    %v302 = vunpack.c.l.b16 %v263
    %v303 = vunpack.c.l.b16 %v264
    %v304 = vpack.c.b16 %v289, %v288
    %v305 = vpack.c.b16 %v291, %v290
    %v306 = vpack.c.b16 %v293, %v292
    %v307 = vpack.c.b16 %v295, %v294
    %v308 = vpack.c.b16 %v297, %v296
    %v309 = vpack.c.b16 %v299, %v298
    %v310 = vpack.c.b16 %v301, %v300
    %v311 = vpack.c.b16 %v303, %v302
    %320 = vmatprep.subr.bf16.mxu0 0
    %321 = vmatpush1.bf16.msra.mxu0 %v304
    %322 = vmatprep.subr.bf16.mxu0 0
    %323 = vmatpush1.bf16.msra.mxu0 %v305
    %324 = vmatprep.subr.bf16.mxu0 0
    %325 = vmatpush1.bf16.msra.mxu0 %v306
    %326 = vmatprep.subr.bf16.mxu0 0
    %327 = vmatpush1.bf16.msra.mxu0 %v307
    %328 = vmatprep.subr.bf16.mxu0 0
    %329 = vmatpush1.bf16.msra.mxu0 %v308
    %330 = vmatprep.subr.bf16.mxu0 0
    %331 = vmatpush1.bf16.msra.mxu0 %v309
    %332 = vmatprep.subr.bf16.mxu0 0
    %333 = vmatpush1.bf16.msra.mxu0 %v310
    %334 = vmatprep.subr.bf16.mxu0 0
    %335 = vmatpush1.bf16.msra.mxu0 %v311
    %336 = vmatprep.subr.bf16.mxu0 0
    %337 = vmatpush1.bf16.msra.mxu0 0
    %338 = vmatprep.subr.bf16.mxu0 0
    %339 = vmatpush1.bf16.msra.mxu0 0
    %340 = vmatprep.subr.bf16.mxu0 0
    %341 = vmatpush1.bf16.msra.mxu0 0
    %342 = vmatprep.subr.bf16.mxu0 0
    %343 = vmatpush1.bf16.msra.mxu0 0
    %344 = vmatprep.subr.bf16.mxu0 0
    %345 = vmatpush1.bf16.msra.mxu0 0
    %346 = vmatprep.subr.bf16.mxu0 0
    %347 = vmatpush1.bf16.msra.mxu0 0
    %348 = vmatprep.subr.bf16.mxu0 0
    %349 = vmatpush1.bf16.msra.mxu0 0
    %350 = vmatprep.subr.bf16.mxu0 0
    %351 = vmatpush1.bf16.msra.mxu0 0
    %352 = vmatprep.mubr.bf16.mxu0 0
    %353 = vmatmul.mubr.bf16.gmra.mrb[0].mxu0 %v248
    %v354 = vpop.f32.mrb[0].mxu0
    %v355 = vadd.f32 %v270, %v354
    %v356 = vpop.f32.mrb[0].mxu0
    %v357 = vpop.f32.mrb[0].mxu0
    %v358 = vadd.f32 %v270, %v357
    %v359 = vpop.f32.mrb[0].mxu0
    %360 = vdwg.mxu0
    %v361 = vpack.c.bf16 %v358, %v355
    %v363 = vunpack.c.l.b16 %v361
    %v364 = vunpack.c.h.b16 %v361
    %v365 = vpack.c.b16 %v363, %v363
    %v366 = vpack.c.b16 %v364, %v364
    %369 = vst [vmem:[%s7] sm:$0xf] %v365
    %370 = vst [vmem:[%s7 + $0x4] sm:$0xf] %v366
    // Predicated region
    $region38: #{dqn_forward.1} parent=1 // pred_check
      _
    $region39: #{dqn_forward.1} parent=1 // pred_check_branch
      %372 = sbr.rel (0) target = $region41
    $region40: #{dqn_forward.1} parent=1 // pred_region
      _
    $region41: #{dqn_forward.1} parent=1 // pred_fallthru
      _
    // Predicated region
    $region42: #{dqn_forward.1} parent=1 // pred_check
      _
    $region43: #{dqn_forward.1} parent=1 // pred_check_branch
      %374 = sbr.rel (0) target = $region45
    $region44: #{dqn_forward.1} parent=1 // pred_region
      _
    $region45: #{dqn_forward.1} parent=1 // pred_fallthru
      _
    %375 = vsyncpa [#allocation3], 1
    %376 = vsyncpa [#allocation5], 1

</llo_original>
